<compile_context>
chip_gen: v7x
topology: tpu7x:2x2x1
jax: 0.10.0
libtpu: 0.0.40
codegen_flags: <defaults>
</compile_context>

<pallas_src>
import math
import functools

import jax
import jax.numpy as jnp
from jax.experimental import pallas as pl
from jax.experimental.pallas import tpu as pltpu

LANE = 128
SQRT2 = math.sqrt(2.0)


def _round_up(x, m):
    return (x + m - 1) // m * m


def _fused_mlp_kernel(x_ref, w0_ref, wh_ref, wf_ref, o_ref, h_ref, *,
                      n_hidden, scale):
    """One batch tile of the full MLP.

    x_ref : (TB, K_pad)      bf16   input tile (K zero-padded to 128 multiple)
    w0_ref: (K_pad, W)       bf16   initial weight, already (in, out)
    wh_ref: (L, W, W)        bf16   stacked hidden weights, (in, out) each
    wf_ref: (W, N_pad)       bf16   final weight, (in, out), N padded to 128
    o_ref : (TB, N_pad)      f32    lane-dense output tile
    h_ref : (TB, W)          bf16   VMEM scratch holding the activation
    """
    # initial layer + relu*sqrt2
    h = jnp.dot(x_ref[...], w0_ref[...], preferred_element_type=jnp.float32)
    h = jnp.maximum(h, 0.0) * scale
    h_ref[...] = h.astype(h_ref.dtype)

    # hidden layers (n_hidden is a compile-time constant -> fully unrolled,
    # activation stays resident in VMEM the whole time)
    for l in range(n_hidden):
        hh = jnp.dot(h_ref[...], wh_ref[l],
                     preferred_element_type=jnp.float32)
        hh = jnp.maximum(hh, 0.0) * scale
        h_ref[...] = hh.astype(h_ref.dtype)

    # final layer, no activation; store a lane-dense (TB, N_pad) block
    y = jnp.dot(h_ref[...], wf_ref[...], preferred_element_type=jnp.float32)
    o_ref[...] = y.astype(o_ref.dtype)


def init_params(key, depth, width, k_classes, in_features=784):
    """Raw parameters in PyTorch nn.Linear layout (out, in), f32,
    U(-1/sqrt(fan_in), 1/sqrt(fan_in)) like torch's default init."""
    params = {}
    key, k0 = jax.random.split(key)
    bound = 1.0 / math.sqrt(in_features)
    params["initial"] = jax.random.uniform(
        k0, (width, in_features), jnp.float32, -bound, bound)
    hidden = []
    bound = 1.0 / math.sqrt(width)
    for _ in range(depth - 2):
        key, kh = jax.random.split(key)
        hidden.append(jax.random.uniform(
            kh, (width, width), jnp.float32, -bound, bound))
    params["layers"] = hidden
    key, kf = jax.random.split(key)
    params["final"] = jax.random.uniform(
        kf, (k_classes, width), jnp.float32, -bound, bound)
    return params


def prepare_kernel_params(raw, in_features=784):
    """One-time preprocessing: transpose to (in, out), zero-pad K and N to
    multiples of 128, stack hidden weights, cast everything to bf16."""
    width = raw["initial"].shape[0]
    k_classes = raw["final"].shape[0]
    assert width % LANE == 0, "width must be a multiple of 128 for this kernel"

    k_pad = _round_up(in_features, LANE)   # 784 -> 896
    n_pad = _round_up(k_classes, LANE)     # 10  -> 128

    w0_t = jnp.zeros((k_pad, width), jnp.float32)
    w0_t = w0_t.at[:in_features, :].set(raw["initial"].T)

    n_hidden = len(raw["layers"])
    if n_hidden > 0:
        wh_t = jnp.stack([w.T for w in raw["layers"]], axis=0)
    else:
        wh_t = jnp.zeros((1, width, width), jnp.float32)

    wf_t = jnp.zeros((width, n_pad), jnp.float32)
    wf_t = wf_t.at[:, :k_classes].set(raw["final"].T)

    return {
        "w0_t": w0_t.astype(jnp.bfloat16),
        "wh_t": wh_t.astype(jnp.bfloat16),
        "wf_t": wf_t.astype(jnp.bfloat16),
        "n_hidden": n_hidden,
        "width": width,
        "k_classes": k_classes,
        "in_features": in_features,
        "k_pad": k_pad,
        "n_pad": n_pad,
    }


def simple_net_multiclass_forward(kp, x):
    """Single fused pallas_call for the whole network. x: (B, 784) f32."""
    B, F = x.shape
    assert F == kp["in_features"]
    width, k_pad, n_pad = kp["width"], kp["k_pad"], kp["n_pad"]
    n_hidden = kp["n_hidden"]
    L = max(n_hidden, 1)

    # batch tiling: tile of up to 128 rows, grid axis marked "parallel"
    tb = min(128, _round_up(B, 8))
    b_pad = _round_up(B, tb)

    x_p = jnp.zeros((b_pad, k_pad), jnp.bfloat16)
    x_p = x_p.at[:B, :F].set(x.astype(jnp.bfloat16))

    kernel = functools.partial(_fused_mlp_kernel, n_hidden=n_hidden,
                               scale=SQRT2)

    flops = 2 * b_pad * (k_pad * width + n_hidden * width * width
                         + width * n_pad)
    bytes_accessed = (x_p.size * 2 + kp["w0_t"].size * 2
                      + kp["wh_t"].size * 2 + kp["wf_t"].size * 2
                      + b_pad * n_pad * 4)

    out = pl.pallas_call(
        kernel,
        out_shape=jax.ShapeDtypeStruct((b_pad, n_pad), jnp.float32),
        grid=(b_pad // tb,),
        in_specs=[
            pl.BlockSpec((tb, k_pad), lambda b: (b, 0)),       # x tile
            pl.BlockSpec((k_pad, width), lambda b: (0, 0)),    # initial W
            pl.BlockSpec((L, width, width), lambda b: (0, 0, 0)),  # hidden Ws
            pl.BlockSpec((width, n_pad), lambda b: (0, 0)),    # final W
        ],
        out_specs=pl.BlockSpec((tb, n_pad), lambda b: (b, 0)),
        scratch_shapes=[pltpu.VMEM((tb, width), jnp.bfloat16)],
        compiler_params=pltpu.CompilerParams(
            dimension_semantics=("parallel",),
        ),
        cost_estimate=pl.CostEstimate(
            flops=flops, transcendentals=0, bytes_accessed=bytes_accessed),
    )(x_p, kp["w0_t"], kp["wh_t"], kp["wf_t"])

    return out[:B, :kp["k_classes"]]


def reference_forward(raw, x):
    """Pure-JAX f32 reference matching the PyTorch module."""
    h = x @ raw["initial"].T
    h = jnp.maximum(h, 0.0) * SQRT2
    for w in raw["layers"]:
        h = h @ w.T
        h = jnp.maximum(h, 0.0) * SQRT2
    return h @ raw["final"].T


if __name__ == "__main__":
    depth, width, k_classes = 4, 128, 10
    batch = 8

    key = jax.random.PRNGKey(0)
    key, kx = jax.random.split(key)
    x = jax.random.normal(kx, (batch, 784), jnp.float32)

    raw_params = init_params(key, depth, width, k_classes)
    kernel_params = prepare_kernel_params(raw_params)

    out = simple_net_multiclass_forward(kernel_params, x)
    out = jax.block_until_ready(out)

    ref = reference_forward(raw_params, x)
    assert out.shape == (batch, k_classes), out.shape
    # bf16 inputs/weights with f32 accumulation -> loosened tolerance vs f32 ref
    max_err = float(jnp.max(jnp.abs(out - ref)))
    assert jnp.allclose(out, ref, atol=3e-2, rtol=3e-2), max_err

    print("KERNEL_OK")
</pallas_src>

<mosaic_0001>
module attributes {stable_mosaic.version = 11 : i64} {
  func.func @_fused_mlp_kernel(%arg0: i32, %arg1: memref<8x896xbf16, #tpu.memory_space<vmem>>, %arg2: memref<896x128xbf16, #tpu.memory_space<vmem>>, %arg3: memref<2x128x128xbf16, #tpu.memory_space<vmem>>, %arg4: memref<128x128xbf16, #tpu.memory_space<vmem>>, %arg5: memref<8x128xf32, #tpu.memory_space<vmem>>, %arg6: memref<8x128xbf16, #tpu.memory_space<vmem>>) attributes {dimension_semantics = [#tpu.dimension_semantics<parallel>], iteration_bounds = array<i64: 1>, scalar_prefetch = 0 : i64, scratch_operands = 1 : i64, tpu.core_type = #tpu.core_type<tc>, window_params = [{transform_indices = @transform_0, window_bounds = array<i64: 8, 896>}, {pipeline_mode = #tpu.pipeline_mode<synchronous>, transform_indices = @transform_1, window_bounds = array<i64: 896, 128>}, {pipeline_mode = #tpu.pipeline_mode<synchronous>, transform_indices = @transform_2, window_bounds = array<i64: 2, 128, 128>}, {pipeline_mode = #tpu.pipeline_mode<synchronous>, transform_indices = @transform_3, window_bounds = array<i64: 128, 128>}, {transform_indices = @transform_4, window_bounds = array<i64: 8, 128>}]} {
    %c0 = arith.constant 0 : index
    %c0_0 = arith.constant 0 : index
    %0 = vector.load %arg1[%c0, %c0_0] : memref<8x896xbf16, #tpu.memory_space<vmem>>, vector<8x896xbf16>
    %c0_1 = arith.constant 0 : index
    %c0_2 = arith.constant 0 : index
    %1 = vector.load %arg2[%c0_1, %c0_2] : memref<896x128xbf16, #tpu.memory_space<vmem>>, vector<896x128xbf16>
    %cst = arith.constant dense<0.000000e+00> : vector<8x128xf32>
    %2 = tpu.matmul %0, %1, %cst {dimension_numbers = #tpu.dot_dimension_numbers<[1], [0], [0], [1], [0, 0, 1, 1], [], []>} : vector<8x896xbf16>, vector<896x128xbf16>, vector<8x128xf32> -> vector<8x128xf32>
    %cst_3 = arith.constant 0.000000e+00 : f32
    %3 = vector.broadcast %cst_3 : f32 to vector<8x128xf32>
    %4 = arith.maximumf %2, %3 : vector<8x128xf32>
    %cst_4 = arith.constant 1.41421354 : f32
    %5 = vector.broadcast %cst_4 : f32 to vector<8x128xf32>
    %6 = arith.mulf %4, %5 : vector<8x128xf32>
    %7 = arith.truncf %6 : vector<8x128xf32> to vector<8x128xbf16>
    %c0_5 = arith.constant 0 : index
    %c0_6 = arith.constant 0 : index
    %8 = vector.load %arg6[%c0_5, %c0_6] : memref<8x128xbf16, #tpu.memory_space<vmem>>, vector<8x128xbf16>
    tpu.vector_store %arg6[%c0_5, %c0_6], %7 {strides = array<i32>} : memref<8x128xbf16, #tpu.memory_space<vmem>>, vector<8x128xbf16>,
    %c0_7 = arith.constant 0 : index
    %c0_8 = arith.constant 0 : index
    %9 = vector.load %arg6[%c0_7, %c0_8] : memref<8x128xbf16, #tpu.memory_space<vmem>>, vector<8x128xbf16>
    %c0_9 = arith.constant 0 : index
    %c0_10 = arith.constant 0 : index
    %c0_11 = arith.constant 0 : index
    %10 = vector.load %arg3[%c0_9, %c0_10, %c0_11] : memref<2x128x128xbf16, #tpu.memory_space<vmem>>, vector<1x128x128xbf16>
    %11 = vector.shape_cast %10 : vector<1x128x128xbf16> to vector<128x128xbf16>
    %cst_12 = arith.constant dense<0.000000e+00> : vector<8x128xf32>
    %12 = tpu.matmul %9, %11, %cst_12 {dimension_numbers = #tpu.dot_dimension_numbers<[1], [0], [0], [1], [0, 0, 1, 1], [], []>} : vector<8x128xbf16>, vector<128x128xbf16>, vector<8x128xf32> -> vector<8x128xf32>
    %cst_13 = arith.constant 0.000000e+00 : f32
    %13 = vector.broadcast %cst_13 : f32 to vector<8x128xf32>
    %14 = arith.maximumf %12, %13 : vector<8x128xf32>
    %cst_14 = arith.constant 1.41421354 : f32
    %15 = vector.broadcast %cst_14 : f32 to vector<8x128xf32>
    %16 = arith.mulf %14, %15 : vector<8x128xf32>
    %17 = arith.truncf %16 : vector<8x128xf32> to vector<8x128xbf16>
    %c0_15 = arith.constant 0 : index
    %c0_16 = arith.constant 0 : index
    %18 = vector.load %arg6[%c0_15, %c0_16] : memref<8x128xbf16, #tpu.memory_space<vmem>>, vector<8x128xbf16>
    tpu.vector_store %arg6[%c0_15, %c0_16], %17 {strides = array<i32>} : memref<8x128xbf16, #tpu.memory_space<vmem>>, vector<8x128xbf16>,
    %c0_17 = arith.constant 0 : index
    %c0_18 = arith.constant 0 : index
    %19 = vector.load %arg6[%c0_17, %c0_18] : memref<8x128xbf16, #tpu.memory_space<vmem>>, vector<8x128xbf16>
    %c1 = arith.constant 1 : index
    %c0_19 = arith.constant 0 : index
    %c0_20 = arith.constant 0 : index
    %20 = vector.load %arg3[%c1, %c0_19, %c0_20] : memref<2x128x128xbf16, #tpu.memory_space<vmem>>, vector<1x128x128xbf16>
    %21 = vector.shape_cast %20 : vector<1x128x128xbf16> to vector<128x128xbf16>
    %cst_21 = arith.constant dense<0.000000e+00> : vector<8x128xf32>
    %22 = tpu.matmul %19, %21, %cst_21 {dimension_numbers = #tpu.dot_dimension_numbers<[1], [0], [0], [1], [0, 0, 1, 1], [], []>} : vector<8x128xbf16>, vector<128x128xbf16>, vector<8x128xf32> -> vector<8x128xf32>
    %cst_22 = arith.constant 0.000000e+00 : f32
    %23 = vector.broadcast %cst_22 : f32 to vector<8x128xf32>
    %24 = arith.maximumf %22, %23 : vector<8x128xf32>
    %cst_23 = arith.constant 1.41421354 : f32
    %25 = vector.broadcast %cst_23 : f32 to vector<8x128xf32>
    %26 = arith.mulf %24, %25 : vector<8x128xf32>
    %27 = arith.truncf %26 : vector<8x128xf32> to vector<8x128xbf16>
    %c0_24 = arith.constant 0 : index
    %c0_25 = arith.constant 0 : index
    %28 = vector.load %arg6[%c0_24, %c0_25] : memref<8x128xbf16, #tpu.memory_space<vmem>>, vector<8x128xbf16>
    tpu.vector_store %arg6[%c0_24, %c0_25], %27 {strides = array<i32>} : memref<8x128xbf16, #tpu.memory_space<vmem>>, vector<8x128xbf16>,
    %c0_26 = arith.constant 0 : index
    %c0_27 = arith.constant 0 : index
    %29 = vector.load %arg6[%c0_26, %c0_27] : memref<8x128xbf16, #tpu.memory_space<vmem>>, vector<8x128xbf16>
    %c0_28 = arith.constant 0 : index
    %c0_29 = arith.constant 0 : index
    %30 = vector.load %arg4[%c0_28, %c0_29] : memref<128x128xbf16, #tpu.memory_space<vmem>>, vector<128x128xbf16>
    %cst_30 = arith.constant dense<0.000000e+00> : vector<8x128xf32>
    %31 = tpu.matmul %29, %30, %cst_30 {dimension_numbers = #tpu.dot_dimension_numbers<[1], [0], [0], [1], [0, 0, 1, 1], [], []>} : vector<8x128xbf16>, vector<128x128xbf16>, vector<8x128xf32> -> vector<8x128xf32>
    %c0_31 = arith.constant 0 : index
    %c0_32 = arith.constant 0 : index
    %32 = vector.load %arg5[%c0_31, %c0_32] : memref<8x128xf32, #tpu.memory_space<vmem>>, vector<8x128xf32>
    tpu.vector_store %arg5[%c0_31, %c0_32], %31 {strides = array<i32>} : memref<8x128xf32, #tpu.memory_space<vmem>>, vector<8x128xf32>,
    return
  }
  func.func @transform_0(%arg0: i32) -> (i32, i32) {
    %c0_i32 = arith.constant 0 : i32
    %c0_i32_0 = arith.constant 0 : i32
    return %arg0, %c0_i32 : i32, i32
  }
  func.func @transform_1(%arg0: i32) -> (i32, i32) {
    %c0_i32 = arith.constant 0 : i32
    %c0_i32_0 = arith.constant 0 : i32
    %c0_i32_1 = arith.constant 0 : i32
    return %c0_i32, %c0_i32_0 : i32, i32
  }
  func.func @transform_2(%arg0: i32) -> (i32, i32, i32) {
    %c0_i32 = arith.constant 0 : i32
    %c0_i32_0 = arith.constant 0 : i32
    %c0_i32_1 = arith.constant 0 : i32
    %c0_i32_2 = arith.constant 0 : i32
    return %c0_i32, %c0_i32_0, %c0_i32_1 : i32, i32, i32
  }
  func.func @transform_3(%arg0: i32) -> (i32, i32) {
    %c0_i32 = arith.constant 0 : i32
    %c0_i32_0 = arith.constant 0 : i32
    %c0_i32_1 = arith.constant 0 : i32
    return %c0_i32, %c0_i32_0 : i32, i32
  }
  func.func @transform_4(%arg0: i32) -> (i32, i32) {
    %c0_i32 = arith.constant 0 : i32
    %c0_i32_0 = arith.constant 0 : i32
    return %arg0, %c0_i32 : i32, i32
  }
}

</mosaic_0001>

<llo_original>
// kernel: tpu_custom_call.1
$region0: #{tpu_custom_call.1}
  #allocation0 [shape = 'u32[]', space=smem, size = 0x4, offset = 0x4, fixed_abs, tag = 'smem constant byte address 0x4 - core index']
  #allocation1 [shape = 'u32[144,128]{1,0:T(1,128)}', space=vmem, size = 0x12000, scoped, tag = 'internal scratch']
  #allocation2 [shape = 'bf16[8,128]{1,0:T(8,128)(2,1)}', space=vmem, size = 0x800, scoped, tag = 'scratch operand']
  %s0 = inlined_call_operand.hbm [shape: bf16[8,896], index: 0, kind: input, shape index: {}]
  %s1 = inlined_call_operand.hbm [shape: bf16[896,128], index: 1, kind: input, shape index: {}]
  %s2 = inlined_call_operand.hbm [shape: bf16[2,128,128], index: 2, kind: input, shape index: {}]
  %s3 = inlined_call_operand.hbm [shape: bf16[128,128], index: 3, kind: input, shape index: {}]
  %s4 = inlined_call_operand.hbm [shape: f32[8,128], index: 4, kind: output, shape index: {}]
  %s5 = sld [smem:[#allocation0]]
  $region42: #{tpu_custom_call.1} parent=0
    _
  %s7 = ssub.s32 1, %s5
  %s8 = scalar_select 0, %s7, %s5
  $region1: #{tpu_custom_call.1} parent=0
    #allocation3 [shape = 'u8[14336]{0}', space=vmem, size = 0x3800, scoped, tag = 'input window, operand 0, single buffered']
    #allocation4 [shape = 's32[1]{0}', space=sflag, size = 0x4, scoped, tag = 'scoped memory for tpu_custom_call.1']
    #allocation5 [shape = 's32[1]{0}', space=sflag, size = 0x4, scoped, tag = 'scoped memory for tpu_custom_call.1']
    #allocation6 [shape = 'u8[229376]{0}', space=vmem, size = 0x38000, scoped, tag = 'input window, operand 1, single buffered']
    #allocation7 [shape = 's32[1]{0}', space=sflag, size = 0x4, scoped, tag = 'scoped memory for tpu_custom_call.1']
    #allocation8 [shape = 'u8[65536]{0}', space=vmem, size = 0x10000, scoped, tag = 'input window, operand 2, single buffered']
    #allocation9 [shape = 'u8[32768]{0}', space=vmem, size = 0x8000, scoped, tag = 'input window, operand 3, single buffered']
    #allocation10 [shape = 's32[1]{0}', space=sflag, size = 0x4, scoped, tag = 'scoped memory for tpu_custom_call.1']
    #allocation11 [shape = 'u8[4096]{0}', space=vmem, size = 0x1000, scoped, tag = 'output window, operand 0, single buffered']
    %9 = vsyncpa [#allocation4], 0
    %10 = vsyncpa [#allocation7], 0
    %11 = vsyncpa [#allocation10], 0
    %12 = vsyncpa [#allocation5], 0
    // Predicated region
    $region2: #{tpu_custom_call.1} parent=1 // pred_check
      _
    $region3: #{tpu_custom_call.1} parent=1 // pred_check_branch
      %14 = sbr.rel (0) target = $region5
    $region4: #{tpu_custom_call.1} parent=1 // pred_region
      %s16 = ssub.s32 448, 448
      %17 = vsyncadd [#allocation4], %s16
      %s19 = sshll.u32 [#allocation3], 4
      %s20 = int_to_ptr.vmem [resolvable:$true] %s19
      %22 = dma.hbm_to_vmem [thread:$0]  %s0, 448, %s20, [#allocation4]
    $region5: #{tpu_custom_call.1} parent=1 // pred_fallthru
      _
    // Predicated region
    $region6: #{tpu_custom_call.1} parent=1 // pred_check
      _
    $region7: #{tpu_custom_call.1} parent=1 // pred_check_branch
      %24 = sbr.rel (0) target = $region9
    $region8: #{tpu_custom_call.1} parent=1 // pred_region
      %s26 = ssub.s32 7168, 7168
      %27 = vsyncadd [#allocation7], %s26
      %s28 = sshll.u32 [#allocation6], 4
      %s29 = int_to_ptr.vmem [resolvable:$true] %s28
      %34 = dma.hbm_to_vmem [thread:$0]  %s1, 7168, %s29, [#allocation7], 64, 64, 4
    $region9: #{tpu_custom_call.1} parent=1 // pred_fallthru
      _
    // Predicated region
    $region10: #{tpu_custom_call.1} parent=1 // pred_check
      _
    $region11: #{tpu_custom_call.1} parent=1 // pred_check_branch
      %36 = sbr.rel (0) target = $region13
    $region12: #{tpu_custom_call.1} parent=1 // pred_region
      %s38 = ssub.s32 2048, 2048
      %39 = vsyncadd [#allocation7], %s38
      %s40 = sshll.u32 [#allocation8], 4
      %s41 = int_to_ptr.vmem [resolvable:$true] %s40
      %46 = dma.hbm_to_vmem [thread:$0]  %s2, 2048, %s41, [#allocation7], 64, 64, 4
    $region13: #{tpu_custom_call.1} parent=1 // pred_fallthru
      _
    // Predicated region
    $region14: #{tpu_custom_call.1} parent=1 // pred_check
      _
    $region15: #{tpu_custom_call.1} parent=1 // pred_check_branch
      %48 = sbr.rel (0) target = $region17
    $region16: #{tpu_custom_call.1} parent=1 // pred_region
      %s50 = ssub.s32 1024, 1024
      %51 = vsyncadd [#allocation10], %s50
      %s52 = sshll.u32 [#allocation9], 4
      %s53 = int_to_ptr.vmem [resolvable:$true] %s52
      %58 = dma.hbm_to_vmem [thread:$0]  %s3, 1024, %s53, [#allocation10], 64, 64, 4
    $region17: #{tpu_custom_call.1} parent=1 // pred_fallthru
      _
    // Predicated region
    $region18: #{tpu_custom_call.1} parent=1 // pred_check
      _
    $region19: #{tpu_custom_call.1} parent=1 // pred_check_branch
      %60 = sbr.rel (0) target = $region21
    $region20: #{tpu_custom_call.1} parent=1 // pred_region
      %61 = dma.done [#allocation4], 448
    $region21: #{tpu_custom_call.1} parent=1 // pred_fallthru
      _
    // Predicated region
    $region22: #{tpu_custom_call.1} parent=1 // pred_check
      _
    $region23: #{tpu_custom_call.1} parent=1 // pred_check_branch
      %63 = sbr.rel (0) target = $region25
    $region24: #{tpu_custom_call.1} parent=1 // pred_region
      %64 = dma.done [#allocation7], 7168
    $region25: #{tpu_custom_call.1} parent=1 // pred_fallthru
      _
    // Predicated region
    $region26: #{tpu_custom_call.1} parent=1 // pred_check
      _
    $region27: #{tpu_custom_call.1} parent=1 // pred_check_branch
      %66 = sbr.rel (0) target = $region29
    $region28: #{tpu_custom_call.1} parent=1 // pred_region
      %67 = dma.done [#allocation7], 2048
    $region29: #{tpu_custom_call.1} parent=1 // pred_fallthru
      _
    // Predicated region
    $region30: #{tpu_custom_call.1} parent=1 // pred_check
      _
    $region31: #{tpu_custom_call.1} parent=1 // pred_check_branch
      %69 = sbr.rel (0) target = $region33
    $region32: #{tpu_custom_call.1} parent=1 // pred_region
      %70 = dma.done [#allocation10], 1024
    $region33: #{tpu_custom_call.1} parent=1 // pred_fallthru
      _
    %v72 = vld [vmem:[#allocation3] sm:$0xff]
    %v73 = vld [vmem:[#allocation3 + $0x8] sm:$0xff]
    %v74 = vld [vmem:[#allocation3 + $0x10] sm:$0xff]
    %v75 = vld [vmem:[#allocation3 + $0x18] sm:$0xf]
    %v76 = vld [vmem:[#allocation6] sm:$0xf]
    %v77 = vld [vmem:[#allocation6 + $0x4] sm:$0xf]
    %v78 = vld [vmem:[#allocation6 + $0x8] sm:$0xf]
    %v79 = vld [vmem:[#allocation6 + $0xc] sm:$0xf]
    %v80 = vld [vmem:[#allocation6 + $0x10] sm:$0xf]
    %v81 = vld [vmem:[#allocation6 + $0x14] sm:$0xf]
    %v82 = vld [vmem:[#allocation6 + $0x18] sm:$0xf]
    %v83 = vld [vmem:[#allocation6 + $0x1c] sm:$0xf]
    %v84 = vld [vmem:[#allocation6 + $0x20] sm:$0xf]
    %v85 = vld [vmem:[#allocation6 + $0x24] sm:$0xf]
    %v86 = vld [vmem:[#allocation6 + $0x28] sm:$0xf]
    %v87 = vld [vmem:[#allocation6 + $0x2c] sm:$0xf]
    %v88 = vld [vmem:[#allocation6 + $0x30] sm:$0xf]
    %v89 = vld [vmem:[#allocation6 + $0x34] sm:$0xf]
    %v90 = vld [vmem:[#allocation6 + $0x38] sm:$0xf]
    %v91 = vld [vmem:[#allocation6 + $0x3c] sm:$0xf]
    %v92 = vld [vmem:[#allocation6 + $0x40] sm:$0xf]
    %v93 = vld [vmem:[#allocation6 + $0x44] sm:$0xf]
    %v94 = vld [vmem:[#allocation6 + $0x48] sm:$0xf]
    %v95 = vld [vmem:[#allocation6 + $0x4c] sm:$0xf]
    %v96 = vld [vmem:[#allocation6 + $0x50] sm:$0xf]
    %v97 = vld [vmem:[#allocation6 + $0x54] sm:$0xf]
    %v98 = vld [vmem:[#allocation6 + $0x58] sm:$0xf]
    %v99 = vld [vmem:[#allocation6 + $0x5c] sm:$0xf]
    %v100 = vld [vmem:[#allocation6 + $0x60] sm:$0xf]
    %v101 = vld [vmem:[#allocation6 + $0x64] sm:$0xf]
    %v102 = vld [vmem:[#allocation6 + $0x68] sm:$0xf]
    %v103 = vld [vmem:[#allocation6 + $0x6c] sm:$0xf]
    %v104 = vld [vmem:[#allocation6 + $0x70] sm:$0xf]
    %v105 = vld [vmem:[#allocation6 + $0x74] sm:$0xf]
    %v106 = vld [vmem:[#allocation6 + $0x78] sm:$0xf]
    %v107 = vld [vmem:[#allocation6 + $0x7c] sm:$0xf]
    %v108 = vld [vmem:[#allocation6 + $0x80] sm:$0xf]
    %v109 = vld [vmem:[#allocation6 + $0x84] sm:$0xf]
    %v110 = vld [vmem:[#allocation6 + $0x88] sm:$0xf]
    %v111 = vld [vmem:[#allocation6 + $0x8c] sm:$0xf]
    %v112 = vld [vmem:[#allocation6 + $0x90] sm:$0xf]
    %v113 = vld [vmem:[#allocation6 + $0x94] sm:$0xf]
    %v114 = vld [vmem:[#allocation6 + $0x98] sm:$0xf]
    %v115 = vld [vmem:[#allocation6 + $0x9c] sm:$0xf]
    %v116 = vld [vmem:[#allocation6 + $0xa0] sm:$0xf]
    %v117 = vld [vmem:[#allocation6 + $0xa4] sm:$0xf]
    %v118 = vld [vmem:[#allocation6 + $0xa8] sm:$0xf]
    %v119 = vld [vmem:[#allocation6 + $0xac] sm:$0xf]
    %v120 = vld [vmem:[#allocation6 + $0xb0] sm:$0xf]
    %v121 = vld [vmem:[#allocation6 + $0xb4] sm:$0xf]
    %v122 = vld [vmem:[#allocation6 + $0xb8] sm:$0xf]
    %v123 = vld [vmem:[#allocation6 + $0xbc] sm:$0xf]
    %v124 = vld [vmem:[#allocation6 + $0xc0] sm:$0xf]
    %v125 = vld [vmem:[#allocation6 + $0xc4] sm:$0xf]
    %v126 = vld [vmem:[#allocation6 + $0xc8] sm:$0xf]
    %v127 = vld [vmem:[#allocation6 + $0xcc] sm:$0xf]
    %v128 = vld [vmem:[#allocation6 + $0xd0] sm:$0xf]
    %v129 = vld [vmem:[#allocation6 + $0xd4] sm:$0xf]
    %v130 = vld [vmem:[#allocation6 + $0xd8] sm:$0xf]
    %v131 = vld [vmem:[#allocation6 + $0xdc] sm:$0xf]
    %v132 = vld [vmem:[#allocation6 + $0xe0] sm:$0xf]
    %v133 = vld [vmem:[#allocation6 + $0xe4] sm:$0xf]
    %v134 = vld [vmem:[#allocation6 + $0xe8] sm:$0xf]
    %v135 = vld [vmem:[#allocation6 + $0xec] sm:$0xf]
    %v136 = vld [vmem:[#allocation6 + $0xf0] sm:$0xf]
    %v137 = vld [vmem:[#allocation6 + $0xf4] sm:$0xf]
    %v138 = vld [vmem:[#allocation6 + $0xf8] sm:$0xf]
    %v139 = vld [vmem:[#allocation6 + $0xfc] sm:$0xf]
    %v140 = vld [vmem:[#allocation6 + $0x100] sm:$0xf]
    %v141 = vld [vmem:[#allocation6 + $0x104] sm:$0xf]
    %v142 = vld [vmem:[#allocation6 + $0x108] sm:$0xf]
    %v143 = vld [vmem:[#allocation6 + $0x10c] sm:$0xf]
    %v144 = vld [vmem:[#allocation6 + $0x110] sm:$0xf]
    %v145 = vld [vmem:[#allocation6 + $0x114] sm:$0xf]
    %v146 = vld [vmem:[#allocation6 + $0x118] sm:$0xf]
    %v147 = vld [vmem:[#allocation6 + $0x11c] sm:$0xf]
    %v148 = vld [vmem:[#allocation6 + $0x120] sm:$0xf]
    %v149 = vld [vmem:[#allocation6 + $0x124] sm:$0xf]
    %v150 = vld [vmem:[#allocation6 + $0x128] sm:$0xf]
    %v151 = vld [vmem:[#allocation6 + $0x12c] sm:$0xf]
    %v152 = vld [vmem:[#allocation6 + $0x130] sm:$0xf]
    %v153 = vld [vmem:[#allocation6 + $0x134] sm:$0xf]
    %v154 = vld [vmem:[#allocation6 + $0x138] sm:$0xf]
    %v155 = vld [vmem:[#allocation6 + $0x13c] sm:$0xf]
    %v156 = vld [vmem:[#allocation6 + $0x140] sm:$0xf]
    %v157 = vld [vmem:[#allocation6 + $0x144] sm:$0xf]
    %v158 = vld [vmem:[#allocation6 + $0x148] sm:$0xf]
    %v159 = vld [vmem:[#allocation6 + $0x14c] sm:$0xf]
    %v160 = vld [vmem:[#allocation6 + $0x150] sm:$0xf]
    %v161 = vld [vmem:[#allocation6 + $0x154] sm:$0xf]
    %v162 = vld [vmem:[#allocation6 + $0x158] sm:$0xf]
    %v163 = vld [vmem:[#allocation6 + $0x15c] sm:$0xf]
    %v164 = vld [vmem:[#allocation6 + $0x160] sm:$0xf]
    %v165 = vld [vmem:[#allocation6 + $0x164] sm:$0xf]
    %v166 = vld [vmem:[#allocation6 + $0x168] sm:$0xf]
    %v167 = vld [vmem:[#allocation6 + $0x16c] sm:$0xf]
    %v168 = vld [vmem:[#allocation6 + $0x170] sm:$0xf]
    %v169 = vld [vmem:[#allocation6 + $0x174] sm:$0xf]
    %v170 = vld [vmem:[#allocation6 + $0x178] sm:$0xf]
    %v171 = vld [vmem:[#allocation6 + $0x17c] sm:$0xf]
    %v172 = vld [vmem:[#allocation6 + $0x180] sm:$0xf]
    %v173 = vld [vmem:[#allocation6 + $0x184] sm:$0xf]
    %v174 = vld [vmem:[#allocation6 + $0x188] sm:$0xf]
    %v175 = vld [vmem:[#allocation6 + $0x18c] sm:$0xf]
    %v176 = vld [vmem:[#allocation6 + $0x190] sm:$0xf]
    %v177 = vld [vmem:[#allocation6 + $0x194] sm:$0xf]
    %v178 = vld [vmem:[#allocation6 + $0x198] sm:$0xf]
    %v179 = vld [vmem:[#allocation6 + $0x19c] sm:$0xf]
    %v180 = vld [vmem:[#allocation6 + $0x1a0] sm:$0xf]
    %v181 = vld [vmem:[#allocation6 + $0x1a4] sm:$0xf]
    %v182 = vld [vmem:[#allocation6 + $0x1a8] sm:$0xf]
    %v183 = vld [vmem:[#allocation6 + $0x1ac] sm:$0xf]
    %v184 = vld [vmem:[#allocation6 + $0x1b0] sm:$0xf]
    %v185 = vld [vmem:[#allocation6 + $0x1b4] sm:$0xf]
    %v186 = vld [vmem:[#allocation6 + $0x1b8] sm:$0xf]
    %v187 = vld [vmem:[#allocation6 + $0x1bc] sm:$0xf]
    %v192 = vunpack.c.l.b16 %v72
    %v193 = vunpack.c.h.b16 %v72
    %v194 = vunpack.c.l.b16 %v73
    %v195 = vunpack.c.h.b16 %v73
    %v196 = vunpack.c.l.b16 %v74
    %v197 = vunpack.c.h.b16 %v74
    %v198 = vunpack.c.l.b16 %v75
    %v199 = vpack.c.b16 %v192, %v192
    %v200 = vpack.c.b16 %v193, %v193
    %v201 = vpack.c.b16 %v194, %v194
    %v202 = vpack.c.b16 %v195, %v195
    %v203 = vpack.c.b16 %v196, %v196
    %v204 = vpack.c.b16 %v197, %v197
    %v205 = vpack.c.b16 %v198, %v198
    %v325 = vunpack.c.l.b16 %v76
    %v326 = vunpack.c.l.b16 %v77
    %v327 = vunpack.c.l.b16 %v78
    %v328 = vunpack.c.l.b16 %v79
    %v329 = vunpack.c.l.b16 %v80
    %v330 = vunpack.c.l.b16 %v81
    %v331 = vunpack.c.l.b16 %v82
    %v332 = vunpack.c.l.b16 %v83
    %v333 = vunpack.c.l.b16 %v84
    %v334 = vunpack.c.l.b16 %v85
    %v335 = vunpack.c.l.b16 %v86
    %v336 = vunpack.c.l.b16 %v87
    %v337 = vunpack.c.l.b16 %v88
    %v338 = vunpack.c.l.b16 %v89
    %v339 = vunpack.c.l.b16 %v90
    %v340 = vunpack.c.l.b16 %v91
    %v341 = vunpack.c.l.b16 %v92
    %v342 = vunpack.c.l.b16 %v93
    %v343 = vunpack.c.l.b16 %v94
    %v344 = vunpack.c.l.b16 %v95
    %v345 = vunpack.c.l.b16 %v96
    %v346 = vunpack.c.l.b16 %v97
    %v347 = vunpack.c.l.b16 %v98
    %v348 = vunpack.c.l.b16 %v99
    %v349 = vunpack.c.l.b16 %v100
    %v350 = vunpack.c.l.b16 %v101
    %v351 = vunpack.c.l.b16 %v102
    %v352 = vunpack.c.l.b16 %v103
    %v353 = vunpack.c.l.b16 %v104
    %v354 = vunpack.c.l.b16 %v105
    %v355 = vunpack.c.l.b16 %v106
    %v356 = vunpack.c.l.b16 %v107
    %v357 = vunpack.c.l.b16 %v108
    %v358 = vunpack.c.l.b16 %v109
    %v359 = vunpack.c.l.b16 %v110
    %v360 = vunpack.c.l.b16 %v111
    %v361 = vunpack.c.l.b16 %v112
    %v362 = vunpack.c.l.b16 %v113
    %v363 = vunpack.c.l.b16 %v114
    %v364 = vunpack.c.l.b16 %v115
    %v365 = vunpack.c.l.b16 %v116
    %v366 = vunpack.c.l.b16 %v117
    %v367 = vunpack.c.l.b16 %v118
    %v368 = vunpack.c.l.b16 %v119
    %v369 = vunpack.c.l.b16 %v120
    %v370 = vunpack.c.l.b16 %v121
    %v371 = vunpack.c.l.b16 %v122
    %v372 = vunpack.c.l.b16 %v123
    %v373 = vunpack.c.l.b16 %v124
    %v374 = vunpack.c.l.b16 %v125
    %v375 = vunpack.c.l.b16 %v126
    %v376 = vunpack.c.l.b16 %v127
    %v377 = vunpack.c.l.b16 %v128
    %v378 = vunpack.c.l.b16 %v129
    %v379 = vunpack.c.l.b16 %v130
    %v380 = vunpack.c.l.b16 %v131
    %v381 = vunpack.c.l.b16 %v132
    %v382 = vunpack.c.l.b16 %v133
    %v383 = vunpack.c.l.b16 %v134
    %v384 = vunpack.c.l.b16 %v135
    %v385 = vunpack.c.l.b16 %v136
    %v386 = vunpack.c.l.b16 %v137
    %v387 = vunpack.c.l.b16 %v138
    %v388 = vunpack.c.l.b16 %v139
    %v389 = vunpack.c.l.b16 %v140
    %v390 = vunpack.c.l.b16 %v141
    %v391 = vunpack.c.l.b16 %v142
    %v392 = vunpack.c.l.b16 %v143
    %v393 = vunpack.c.l.b16 %v144
    %v394 = vunpack.c.l.b16 %v145
    %v395 = vunpack.c.l.b16 %v146
    %v396 = vunpack.c.l.b16 %v147
    %v397 = vunpack.c.l.b16 %v148
    %v398 = vunpack.c.l.b16 %v149
    %v399 = vunpack.c.l.b16 %v150
    %v400 = vunpack.c.l.b16 %v151
    %v401 = vunpack.c.l.b16 %v152
    %v402 = vunpack.c.l.b16 %v153
    %v403 = vunpack.c.l.b16 %v154
    %v404 = vunpack.c.l.b16 %v155
    %v405 = vunpack.c.l.b16 %v156
    %v406 = vunpack.c.l.b16 %v157
    %v407 = vunpack.c.l.b16 %v158
    %v408 = vunpack.c.l.b16 %v159
    %v409 = vunpack.c.l.b16 %v160
    %v410 = vunpack.c.l.b16 %v161
    %v411 = vunpack.c.l.b16 %v162
    %v412 = vunpack.c.l.b16 %v163
    %v413 = vunpack.c.l.b16 %v164
    %v414 = vunpack.c.l.b16 %v165
    %v415 = vunpack.c.l.b16 %v166
    %v416 = vunpack.c.l.b16 %v167
    %v417 = vunpack.c.l.b16 %v168
    %v418 = vunpack.c.l.b16 %v169
    %v419 = vunpack.c.l.b16 %v170
    %v420 = vunpack.c.l.b16 %v171
    %v421 = vunpack.c.l.b16 %v172
    %v422 = vunpack.c.l.b16 %v173
    %v423 = vunpack.c.l.b16 %v174
    %v424 = vunpack.c.l.b16 %v175
    %v425 = vunpack.c.l.b16 %v176
    %v426 = vunpack.c.l.b16 %v177
    %v427 = vunpack.c.l.b16 %v178
    %v428 = vunpack.c.l.b16 %v179
    %v429 = vunpack.c.l.b16 %v180
    %v430 = vunpack.c.l.b16 %v181
    %v431 = vunpack.c.l.b16 %v182
    %v432 = vunpack.c.l.b16 %v183
    %v433 = vunpack.c.l.b16 %v184
    %v434 = vunpack.c.l.b16 %v185
    %v435 = vunpack.c.l.b16 %v186
    %v436 = vunpack.c.l.b16 %v187
    %v437 = vpack.c.b16 %v326, %v325
    %v438 = vpack.c.b16 %v328, %v327
    %v439 = vpack.c.b16 %v330, %v329
    %v440 = vpack.c.b16 %v332, %v331
    %v441 = vpack.c.b16 %v334, %v333
    %v442 = vpack.c.b16 %v336, %v335
    %v443 = vpack.c.b16 %v338, %v337
    %v444 = vpack.c.b16 %v340, %v339
    %v445 = vpack.c.b16 %v342, %v341
    %v446 = vpack.c.b16 %v344, %v343
    %v447 = vpack.c.b16 %v346, %v345
    %v448 = vpack.c.b16 %v348, %v347
    %v449 = vpack.c.b16 %v350, %v349
    %v450 = vpack.c.b16 %v352, %v351
    %v451 = vpack.c.b16 %v354, %v353
    %v452 = vpack.c.b16 %v356, %v355
    %v453 = vpack.c.b16 %v358, %v357
    %v454 = vpack.c.b16 %v360, %v359
    %v455 = vpack.c.b16 %v362, %v361
    %v456 = vpack.c.b16 %v364, %v363
    %v457 = vpack.c.b16 %v366, %v365
    %v458 = vpack.c.b16 %v368, %v367
    %v459 = vpack.c.b16 %v370, %v369
    %v460 = vpack.c.b16 %v372, %v371
    %v461 = vpack.c.b16 %v374, %v373
    %v462 = vpack.c.b16 %v376, %v375
    %v463 = vpack.c.b16 %v378, %v377
    %v464 = vpack.c.b16 %v380, %v379
    %v465 = vpack.c.b16 %v382, %v381
    %v466 = vpack.c.b16 %v384, %v383
    %v467 = vpack.c.b16 %v386, %v385
    %v468 = vpack.c.b16 %v388, %v387
    %v469 = vpack.c.b16 %v390, %v389
    %v470 = vpack.c.b16 %v392, %v391
    %v471 = vpack.c.b16 %v394, %v393
    %v472 = vpack.c.b16 %v396, %v395
    %v473 = vpack.c.b16 %v398, %v397
    %v474 = vpack.c.b16 %v400, %v399
    %v475 = vpack.c.b16 %v402, %v401
    %v476 = vpack.c.b16 %v404, %v403
    %v477 = vpack.c.b16 %v406, %v405
    %v478 = vpack.c.b16 %v408, %v407
    %v479 = vpack.c.b16 %v410, %v409
    %v480 = vpack.c.b16 %v412, %v411
    %v481 = vpack.c.b16 %v414, %v413
    %v482 = vpack.c.b16 %v416, %v415
    %v483 = vpack.c.b16 %v418, %v417
    %v484 = vpack.c.b16 %v420, %v419
    %v485 = vpack.c.b16 %v422, %v421
    %v486 = vpack.c.b16 %v424, %v423
    %v487 = vpack.c.b16 %v426, %v425
    %v488 = vpack.c.b16 %v428, %v427
    %v489 = vpack.c.b16 %v430, %v429
    %v490 = vpack.c.b16 %v432, %v431
    %v491 = vpack.c.b16 %v434, %v433
    %v492 = vpack.c.b16 %v436, %v435
    %549 = vmatprep.subr.bf16.mxu0 0
    %550 = vmatpush1.bf16.msra.mxu0 %v437
    %551 = vmatprep.subr.bf16.mxu0 0
    %552 = vmatpush1.bf16.msra.mxu0 %v438
    %553 = vmatprep.subr.bf16.mxu0 0
    %554 = vmatpush1.bf16.msra.mxu0 %v439
    %555 = vmatprep.subr.bf16.mxu0 0
    %556 = vmatpush1.bf16.msra.mxu0 %v440
    %557 = vmatprep.subr.bf16.mxu0 0
    %558 = vmatpush1.bf16.msra.mxu0 %v441
    %559 = vmatprep.subr.bf16.mxu0 0
    %560 = vmatpush1.bf16.msra.mxu0 %v442
    %561 = vmatprep.subr.bf16.mxu0 0
    %562 = vmatpush1.bf16.msra.mxu0 %v443
    %563 = vmatprep.subr.bf16.mxu0 0
    %564 = vmatpush1.bf16.msra.mxu0 %v444
    %565 = vmatprep.subr.bf16.mxu0 0
    %566 = vmatpush1.bf16.msra.mxu0 %v445
    %567 = vmatprep.subr.bf16.mxu0 0
    %568 = vmatpush1.bf16.msra.mxu0 %v446
    %569 = vmatprep.subr.bf16.mxu0 0
    %570 = vmatpush1.bf16.msra.mxu0 %v447
    %571 = vmatprep.subr.bf16.mxu0 0
    %572 = vmatpush1.bf16.msra.mxu0 %v448
    %573 = vmatprep.subr.bf16.mxu0 0
    %574 = vmatpush1.bf16.msra.mxu0 %v449
    %575 = vmatprep.subr.bf16.mxu0 0
    %576 = vmatpush1.bf16.msra.mxu0 %v450
    %577 = vmatprep.subr.bf16.mxu0 0
    %578 = vmatpush1.bf16.msra.mxu0 %v451
    %579 = vmatprep.subr.bf16.mxu0 0
    %580 = vmatpush1.bf16.msra.mxu0 %v452
    %581 = vmatprep.mubr.bf16.mxu0 %v200
    %582 = vmatmul.mubr.bf16.gmra.mrb[0].mxu0 %v199
    %v583 = vpop.f32.mrb[0].mxu0
    %v584 = vadd.f32 0.0, %v583
    %v585 = vpop.f32.mrb[0].mxu0
    %v586 = vpop.f32.mrb[0].mxu0
    %v587 = vpop.f32.mrb[0].mxu0
    %588 = vdwg.mxu0
    %589 = vmatprep.subr.bf16.mxu0 0
    %590 = vmatpush1.bf16.msra.mxu0 %v453
    %591 = vmatprep.subr.bf16.mxu0 0
    %592 = vmatpush1.bf16.msra.mxu0 %v454
    %593 = vmatprep.subr.bf16.mxu0 0
    %594 = vmatpush1.bf16.msra.mxu0 %v455
    %595 = vmatprep.subr.bf16.mxu0 0
    %596 = vmatpush1.bf16.msra.mxu0 %v456
    %597 = vmatprep.subr.bf16.mxu0 0
    %598 = vmatpush1.bf16.msra.mxu0 %v457
    %599 = vmatprep.subr.bf16.mxu0 0
    %600 = vmatpush1.bf16.msra.mxu0 %v458
    %601 = vmatprep.subr.bf16.mxu0 0
    %602 = vmatpush1.bf16.msra.mxu0 %v459
    %603 = vmatprep.subr.bf16.mxu0 0
    %604 = vmatpush1.bf16.msra.mxu0 %v460
    %605 = vmatprep.subr.bf16.mxu0 0
    %606 = vmatpush1.bf16.msra.mxu0 %v461
    %607 = vmatprep.subr.bf16.mxu0 0
    %608 = vmatpush1.bf16.msra.mxu0 %v462
    %609 = vmatprep.subr.bf16.mxu0 0
    %610 = vmatpush1.bf16.msra.mxu0 %v463
    %611 = vmatprep.subr.bf16.mxu0 0
    %612 = vmatpush1.bf16.msra.mxu0 %v464
    %613 = vmatprep.subr.bf16.mxu0 0
    %614 = vmatpush1.bf16.msra.mxu0 %v465
    %615 = vmatprep.subr.bf16.mxu0 0
    %616 = vmatpush1.bf16.msra.mxu0 %v466
    %617 = vmatprep.subr.bf16.mxu0 0
    %618 = vmatpush1.bf16.msra.mxu0 %v467
    %619 = vmatprep.subr.bf16.mxu0 0
    %620 = vmatpush1.bf16.msra.mxu0 %v468
    %621 = vmatprep.mubr.bf16.mxu0 %v202
    %622 = vmatmul.mubr.bf16.gmra.mrb[0].mxu0 %v201
    %v623 = vpop.f32.mrb[0].mxu0
    %v624 = vadd.f32 %v584, %v623
    %v625 = vpop.f32.mrb[0].mxu0
    %v626 = vpop.f32.mrb[0].mxu0
    %v627 = vpop.f32.mrb[0].mxu0
    %628 = vdwg.mxu0
    %629 = vmatprep.subr.bf16.mxu0 0
    %630 = vmatpush1.bf16.msra.mxu0 %v469
    %631 = vmatprep.subr.bf16.mxu0 0
    %632 = vmatpush1.bf16.msra.mxu0 %v470
    %633 = vmatprep.subr.bf16.mxu0 0
    %634 = vmatpush1.bf16.msra.mxu0 %v471
    %635 = vmatprep.subr.bf16.mxu0 0
    %636 = vmatpush1.bf16.msra.mxu0 %v472
    %637 = vmatprep.subr.bf16.mxu0 0
    %638 = vmatpush1.bf16.msra.mxu0 %v473
    %639 = vmatprep.subr.bf16.mxu0 0
    %640 = vmatpush1.bf16.msra.mxu0 %v474
    %641 = vmatprep.subr.bf16.mxu0 0
    %642 = vmatpush1.bf16.msra.mxu0 %v475
    %643 = vmatprep.subr.bf16.mxu0 0
    %644 = vmatpush1.bf16.msra.mxu0 %v476
    %645 = vmatprep.subr.bf16.mxu0 0
    %646 = vmatpush1.bf16.msra.mxu0 %v477
    %647 = vmatprep.subr.bf16.mxu0 0
    %648 = vmatpush1.bf16.msra.mxu0 %v478
    %649 = vmatprep.subr.bf16.mxu0 0
    %650 = vmatpush1.bf16.msra.mxu0 %v479
    %651 = vmatprep.subr.bf16.mxu0 0
    %652 = vmatpush1.bf16.msra.mxu0 %v480
    %653 = vmatprep.subr.bf16.mxu0 0
    %654 = vmatpush1.bf16.msra.mxu0 %v481
    %655 = vmatprep.subr.bf16.mxu0 0
    %656 = vmatpush1.bf16.msra.mxu0 %v482
    %657 = vmatprep.subr.bf16.mxu0 0
    %658 = vmatpush1.bf16.msra.mxu0 %v483
    %659 = vmatprep.subr.bf16.mxu0 0
    %660 = vmatpush1.bf16.msra.mxu0 %v484
    %661 = vmatprep.mubr.bf16.mxu0 %v204
    %662 = vmatmul.mubr.bf16.gmra.mrb[0].mxu0 %v203
    %v663 = vpop.f32.mrb[0].mxu0
    %v664 = vadd.f32 %v624, %v663
    %v665 = vpop.f32.mrb[0].mxu0
    %v666 = vpop.f32.mrb[0].mxu0
    %v667 = vpop.f32.mrb[0].mxu0
    %668 = vdwg.mxu0
    %669 = vmatprep.subr.bf16.mxu0 0
    %670 = vmatpush1.bf16.msra.mxu0 %v485
    %671 = vmatprep.subr.bf16.mxu0 0
    %672 = vmatpush1.bf16.msra.mxu0 %v486
    %673 = vmatprep.subr.bf16.mxu0 0
    %674 = vmatpush1.bf16.msra.mxu0 %v487
    %675 = vmatprep.subr.bf16.mxu0 0
    %676 = vmatpush1.bf16.msra.mxu0 %v488
    %677 = vmatprep.subr.bf16.mxu0 0
    %678 = vmatpush1.bf16.msra.mxu0 %v489
    %679 = vmatprep.subr.bf16.mxu0 0
    %680 = vmatpush1.bf16.msra.mxu0 %v490
    %681 = vmatprep.subr.bf16.mxu0 0
    %682 = vmatpush1.bf16.msra.mxu0 %v491
    %683 = vmatprep.subr.bf16.mxu0 0
    %684 = vmatpush1.bf16.msra.mxu0 %v492
    %685 = vmatprep.subr.bf16.mxu0 0
    %686 = vmatpush1.bf16.msra.mxu0 0
    %687 = vmatprep.subr.bf16.mxu0 0
    %688 = vmatpush1.bf16.msra.mxu0 0
    %689 = vmatprep.subr.bf16.mxu0 0
    %690 = vmatpush1.bf16.msra.mxu0 0
    %691 = vmatprep.subr.bf16.mxu0 0
    %692 = vmatpush1.bf16.msra.mxu0 0
    %693 = vmatprep.subr.bf16.mxu0 0
    %694 = vmatpush1.bf16.msra.mxu0 0
    %695 = vmatprep.subr.bf16.mxu0 0
    %696 = vmatpush1.bf16.msra.mxu0 0
    %697 = vmatprep.subr.bf16.mxu0 0
    %698 = vmatpush1.bf16.msra.mxu0 0
    %699 = vmatprep.subr.bf16.mxu0 0
    %700 = vmatpush1.bf16.msra.mxu0 0
    %701 = vmatprep.mubr.bf16.mxu0 0
    %702 = vmatmul.mubr.bf16.gmra.mrb[0].mxu0 %v205
    %v703 = vpop.f32.mrb[0].mxu0
    %v704 = vadd.f32 %v664, %v703
    %v705 = vpop.f32.mrb[0].mxu0
    %v706 = vpop.f32.mrb[0].mxu0
    %v707 = vpop.f32.mrb[0].mxu0
    %708 = vdwg.mxu0
    %v709 = vmax.f32 %v704, 0.0
    %v710 = vmul.f32 %v709, 1.4142135
    %v711 = vpack.c.bf16 %v710, %v710
    %712 = vst [vmem:[#allocation2] sm:$0xf] %v711
    %v713 = vld [vmem:[#allocation2] sm:$0xf]
    %v714 = vld [vmem:[#allocation8] sm:$0xf]
    %v715 = vld [vmem:[#allocation8 + $0x4] sm:$0xf]
    %v716 = vld [vmem:[#allocation8 + $0x8] sm:$0xf]
    %v717 = vld [vmem:[#allocation8 + $0xc] sm:$0xf]
    %v718 = vld [vmem:[#allocation8 + $0x10] sm:$0xf]
    %v719 = vld [vmem:[#allocation8 + $0x14] sm:$0xf]
    %v720 = vld [vmem:[#allocation8 + $0x18] sm:$0xf]
    %v721 = vld [vmem:[#allocation8 + $0x1c] sm:$0xf]
    %v722 = vld [vmem:[#allocation8 + $0x20] sm:$0xf]
    %v723 = vld [vmem:[#allocation8 + $0x24] sm:$0xf]
    %v724 = vld [vmem:[#allocation8 + $0x28] sm:$0xf]
    %v725 = vld [vmem:[#allocation8 + $0x2c] sm:$0xf]
    %v726 = vld [vmem:[#allocation8 + $0x30] sm:$0xf]
    %v727 = vld [vmem:[#allocation8 + $0x34] sm:$0xf]
    %v728 = vld [vmem:[#allocation8 + $0x38] sm:$0xf]
    %v729 = vld [vmem:[#allocation8 + $0x3c] sm:$0xf]
    %v746 = vunpack.c.l.b16 %v714
    %v747 = vunpack.c.l.b16 %v715
    %v748 = vunpack.c.l.b16 %v716
    %v749 = vunpack.c.l.b16 %v717
    %v750 = vunpack.c.l.b16 %v718
    %v751 = vunpack.c.l.b16 %v719
    %v752 = vunpack.c.l.b16 %v720
    %v753 = vunpack.c.l.b16 %v721
    %v754 = vunpack.c.l.b16 %v722
    %v755 = vunpack.c.l.b16 %v723
    %v756 = vunpack.c.l.b16 %v724
    %v757 = vunpack.c.l.b16 %v725
    %v758 = vunpack.c.l.b16 %v726
    %v759 = vunpack.c.l.b16 %v727
    %v760 = vunpack.c.l.b16 %v728
    %v761 = vunpack.c.l.b16 %v729
    %v762 = vpack.c.b16 %v747, %v746
    %v763 = vpack.c.b16 %v749, %v748
    %v764 = vpack.c.b16 %v751, %v750
    %v765 = vpack.c.b16 %v753, %v752
    %v766 = vpack.c.b16 %v755, %v754
    %v767 = vpack.c.b16 %v757, %v756
    %v768 = vpack.c.b16 %v759, %v758
    %v769 = vpack.c.b16 %v761, %v760
    %778 = vmatprep.subr.bf16.mxu0 0
    %779 = vmatpush1.bf16.msra.mxu0 %v762
    %780 = vmatprep.subr.bf16.mxu0 0
    %781 = vmatpush1.bf16.msra.mxu0 %v763
    %782 = vmatprep.subr.bf16.mxu0 0
    %783 = vmatpush1.bf16.msra.mxu0 %v764
    %784 = vmatprep.subr.bf16.mxu0 0
    %785 = vmatpush1.bf16.msra.mxu0 %v765
    %786 = vmatprep.subr.bf16.mxu0 0
    %787 = vmatpush1.bf16.msra.mxu0 %v766
    %788 = vmatprep.subr.bf16.mxu0 0
    %789 = vmatpush1.bf16.msra.mxu0 %v767
    %790 = vmatprep.subr.bf16.mxu0 0
    %791 = vmatpush1.bf16.msra.mxu0 %v768
    %792 = vmatprep.subr.bf16.mxu0 0
    %793 = vmatpush1.bf16.msra.mxu0 %v769
    %794 = vmatprep.subr.bf16.mxu0 0
    %795 = vmatpush1.bf16.msra.mxu0 0
    %796 = vmatprep.subr.bf16.mxu0 0
    %797 = vmatpush1.bf16.msra.mxu0 0
    %798 = vmatprep.subr.bf16.mxu0 0
    %799 = vmatpush1.bf16.msra.mxu0 0
    %800 = vmatprep.subr.bf16.mxu0 0
    %801 = vmatpush1.bf16.msra.mxu0 0
    %802 = vmatprep.subr.bf16.mxu0 0
    %803 = vmatpush1.bf16.msra.mxu0 0
    %804 = vmatprep.subr.bf16.mxu0 0
    %805 = vmatpush1.bf16.msra.mxu0 0
    %806 = vmatprep.subr.bf16.mxu0 0
    %807 = vmatpush1.bf16.msra.mxu0 0
    %808 = vmatprep.subr.bf16.mxu0 0
    %809 = vmatpush1.bf16.msra.mxu0 0
    %810 = vmatprep.mubr.bf16.mxu0 0
    %811 = vmatmul.mubr.bf16.gmra.mrb[0].mxu0 %v713
    %v812 = vpop.f32.mrb[0].mxu0
    %v813 = vadd.f32 0.0, %v812
    %v814 = vpop.f32.mrb[0].mxu0
    %v815 = vpop.f32.mrb[0].mxu0
    %v816 = vpop.f32.mrb[0].mxu0
    %817 = vdwg.mxu0
    %v818 = vmax.f32 %v813, 0.0
    %v819 = vmul.f32 %v818, 1.4142135
    %v820 = vpack.c.bf16 %v819, %v819
    %821 = vst [vmem:[#allocation2] sm:$0xf] %v820
    %v822 = vld [vmem:[#allocation2] sm:$0xf]
    %s823 = scalar_lea.vmem [#allocation8], 64
    %v824 = vld [vmem:[%s823] sm:$0xf]
    %v825 = vld [vmem:[%s823 + $0x4] sm:$0xf]
    %v826 = vld [vmem:[%s823 + $0x8] sm:$0xf]
    %v827 = vld [vmem:[%s823 + $0xc] sm:$0xf]
    %v828 = vld [vmem:[%s823 + $0x10] sm:$0xf]
    %v829 = vld [vmem:[%s823 + $0x14] sm:$0xf]
    %v830 = vld [vmem:[%s823 + $0x18] sm:$0xf]
    %v831 = vld [vmem:[%s823 + $0x1c] sm:$0xf]
    %v832 = vld [vmem:[%s823 + $0x20] sm:$0xf]
    %v833 = vld [vmem:[%s823 + $0x24] sm:$0xf]
    %v834 = vld [vmem:[%s823 + $0x28] sm:$0xf]
    %v835 = vld [vmem:[%s823 + $0x2c] sm:$0xf]
    %v836 = vld [vmem:[%s823 + $0x30] sm:$0xf]
    %v837 = vld [vmem:[%s823 + $0x34] sm:$0xf]
    %v838 = vld [vmem:[%s823 + $0x38] sm:$0xf]
    %v839 = vld [vmem:[%s823 + $0x3c] sm:$0xf]
    %v856 = vunpack.c.l.b16 %v824
    %v857 = vunpack.c.l.b16 %v825
    %v858 = vunpack.c.l.b16 %v826
    %v859 = vunpack.c.l.b16 %v827
    %v860 = vunpack.c.l.b16 %v828
    %v861 = vunpack.c.l.b16 %v829
    %v862 = vunpack.c.l.b16 %v830
    %v863 = vunpack.c.l.b16 %v831
    %v864 = vunpack.c.l.b16 %v832
    %v865 = vunpack.c.l.b16 %v833
    %v866 = vunpack.c.l.b16 %v834
    %v867 = vunpack.c.l.b16 %v835
    %v868 = vunpack.c.l.b16 %v836
    %v869 = vunpack.c.l.b16 %v837
    %v870 = vunpack.c.l.b16 %v838
    %v871 = vunpack.c.l.b16 %v839
    %v872 = vpack.c.b16 %v857, %v856
    %v873 = vpack.c.b16 %v859, %v858
    %v874 = vpack.c.b16 %v861, %v860
    %v875 = vpack.c.b16 %v863, %v862
    %v876 = vpack.c.b16 %v865, %v864
    %v877 = vpack.c.b16 %v867, %v866
    %v878 = vpack.c.b16 %v869, %v868
    %v879 = vpack.c.b16 %v871, %v870
    %888 = vmatprep.subr.bf16.mxu0 0
    %889 = vmatpush1.bf16.msra.mxu0 %v872
    %890 = vmatprep.subr.bf16.mxu0 0
    %891 = vmatpush1.bf16.msra.mxu0 %v873
    %892 = vmatprep.subr.bf16.mxu0 0
    %893 = vmatpush1.bf16.msra.mxu0 %v874
    %894 = vmatprep.subr.bf16.mxu0 0
    %895 = vmatpush1.bf16.msra.mxu0 %v875
    %896 = vmatprep.subr.bf16.mxu0 0
    %897 = vmatpush1.bf16.msra.mxu0 %v876
    %898 = vmatprep.subr.bf16.mxu0 0
    %899 = vmatpush1.bf16.msra.mxu0 %v877
    %900 = vmatprep.subr.bf16.mxu0 0
    %901 = vmatpush1.bf16.msra.mxu0 %v878
    %902 = vmatprep.subr.bf16.mxu0 0
    %903 = vmatpush1.bf16.msra.mxu0 %v879
    %904 = vmatprep.subr.bf16.mxu0 0
    %905 = vmatpush1.bf16.msra.mxu0 0
    %906 = vmatprep.subr.bf16.mxu0 0
    %907 = vmatpush1.bf16.msra.mxu0 0
    %908 = vmatprep.subr.bf16.mxu0 0
    %909 = vmatpush1.bf16.msra.mxu0 0
    %910 = vmatprep.subr.bf16.mxu0 0
    %911 = vmatpush1.bf16.msra.mxu0 0
    %912 = vmatprep.subr.bf16.mxu0 0
    %913 = vmatpush1.bf16.msra.mxu0 0
    %914 = vmatprep.subr.bf16.mxu0 0
    %915 = vmatpush1.bf16.msra.mxu0 0
    %916 = vmatprep.subr.bf16.mxu0 0
    %917 = vmatpush1.bf16.msra.mxu0 0
    %918 = vmatprep.subr.bf16.mxu0 0
    %919 = vmatpush1.bf16.msra.mxu0 0
    %920 = vmatprep.mubr.bf16.mxu0 0
    %921 = vmatmul.mubr.bf16.gmra.mrb[0].mxu0 %v822
    %v922 = vpop.f32.mrb[0].mxu0
    %v923 = vadd.f32 0.0, %v922
    %v924 = vpop.f32.mrb[0].mxu0
    %v925 = vpop.f32.mrb[0].mxu0
    %v926 = vpop.f32.mrb[0].mxu0
    %927 = vdwg.mxu0
    %v928 = vmax.f32 %v923, 0.0
    %v929 = vmul.f32 %v928, 1.4142135
    %v930 = vpack.c.bf16 %v929, %v929
    %931 = vst [vmem:[#allocation2] sm:$0xf] %v930
    %v932 = vld [vmem:[#allocation2] sm:$0xf]
    %v933 = vld [vmem:[#allocation9] sm:$0xf]
    %v934 = vld [vmem:[#allocation9 + $0x4] sm:$0xf]
    %v935 = vld [vmem:[#allocation9 + $0x8] sm:$0xf]
    %v936 = vld [vmem:[#allocation9 + $0xc] sm:$0xf]
    %v937 = vld [vmem:[#allocation9 + $0x10] sm:$0xf]
    %v938 = vld [vmem:[#allocation9 + $0x14] sm:$0xf]
    %v939 = vld [vmem:[#allocation9 + $0x18] sm:$0xf]
    %v940 = vld [vmem:[#allocation9 + $0x1c] sm:$0xf]
    %v941 = vld [vmem:[#allocation9 + $0x20] sm:$0xf]
    %v942 = vld [vmem:[#allocation9 + $0x24] sm:$0xf]
    %v943 = vld [vmem:[#allocation9 + $0x28] sm:$0xf]
    %v944 = vld [vmem:[#allocation9 + $0x2c] sm:$0xf]
    %v945 = vld [vmem:[#allocation9 + $0x30] sm:$0xf]
    %v946 = vld [vmem:[#allocation9 + $0x34] sm:$0xf]
    %v947 = vld [vmem:[#allocation9 + $0x38] sm:$0xf]
    %v948 = vld [vmem:[#allocation9 + $0x3c] sm:$0xf]
    %v965 = vunpack.c.l.b16 %v933
    %v966 = vunpack.c.l.b16 %v934
    %v967 = vunpack.c.l.b16 %v935
    %v968 = vunpack.c.l.b16 %v936
    %v969 = vunpack.c.l.b16 %v937
    %v970 = vunpack.c.l.b16 %v938
    %v971 = vunpack.c.l.b16 %v939
    %v972 = vunpack.c.l.b16 %v940
    %v973 = vunpack.c.l.b16 %v941
    %v974 = vunpack.c.l.b16 %v942
    %v975 = vunpack.c.l.b16 %v943
    %v976 = vunpack.c.l.b16 %v944
    %v977 = vunpack.c.l.b16 %v945
    %v978 = vunpack.c.l.b16 %v946
    %v979 = vunpack.c.l.b16 %v947
    %v980 = vunpack.c.l.b16 %v948
    %v981 = vpack.c.b16 %v966, %v965
    %v982 = vpack.c.b16 %v968, %v967
    %v983 = vpack.c.b16 %v970, %v969
    %v984 = vpack.c.b16 %v972, %v971
    %v985 = vpack.c.b16 %v974, %v973
    %v986 = vpack.c.b16 %v976, %v975
    %v987 = vpack.c.b16 %v978, %v977
    %v988 = vpack.c.b16 %v980, %v979
    %997 = vmatprep.subr.bf16.mxu0 0
    %998 = vmatpush1.bf16.msra.mxu0 %v981
    %999 = vmatprep.subr.bf16.mxu0 0
    %1000 = vmatpush1.bf16.msra.mxu0 %v982
    %1001 = vmatprep.subr.bf16.mxu0 0
    %1002 = vmatpush1.bf16.msra.mxu0 %v983
    %1003 = vmatprep.subr.bf16.mxu0 0
    %1004 = vmatpush1.bf16.msra.mxu0 %v984
    %1005 = vmatprep.subr.bf16.mxu0 0
    %1006 = vmatpush1.bf16.msra.mxu0 %v985
    %1007 = vmatprep.subr.bf16.mxu0 0
    %1008 = vmatpush1.bf16.msra.mxu0 %v986
    %1009 = vmatprep.subr.bf16.mxu0 0
    %1010 = vmatpush1.bf16.msra.mxu0 %v987
    %1011 = vmatprep.subr.bf16.mxu0 0
    %1012 = vmatpush1.bf16.msra.mxu0 %v988
    %1013 = vmatprep.subr.bf16.mxu0 0
    %1014 = vmatpush1.bf16.msra.mxu0 0
    %1015 = vmatprep.subr.bf16.mxu0 0
    %1016 = vmatpush1.bf16.msra.mxu0 0
    %1017 = vmatprep.subr.bf16.mxu0 0
    %1018 = vmatpush1.bf16.msra.mxu0 0
    %1019 = vmatprep.subr.bf16.mxu0 0
    %1020 = vmatpush1.bf16.msra.mxu0 0
    %1021 = vmatprep.subr.bf16.mxu0 0
    %1022 = vmatpush1.bf16.msra.mxu0 0
    %1023 = vmatprep.subr.bf16.mxu0 0
    %1024 = vmatpush1.bf16.msra.mxu0 0
    %1025 = vmatprep.subr.bf16.mxu0 0
    %1026 = vmatpush1.bf16.msra.mxu0 0
    %1027 = vmatprep.subr.bf16.mxu0 0
    %1028 = vmatpush1.bf16.msra.mxu0 0
    %1029 = vmatprep.mubr.bf16.mxu0 0
    %1030 = vmatmul.mubr.bf16.gmra.mrb[0].mxu0 %v932
    %v1031 = vpop.f32.mrb[0].mxu0
    %v1032 = vadd.f32 0.0, %v1031
    %v1033 = vpop.f32.mrb[0].mxu0
    %v1034 = vpop.f32.mrb[0].mxu0
    %v1035 = vpop.f32.mrb[0].mxu0
    %1036 = vdwg.mxu0
    %1037 = vst [vmem:[#allocation11] sm:$0xff] %v1032
    // Predicated region
    $region34: #{tpu_custom_call.1} parent=1 // pred_check
      _
    $region35: #{tpu_custom_call.1} parent=1 // pred_check_branch
      %1039 = sbr.rel (0) target = $region37
    $region36: #{tpu_custom_call.1} parent=1 // pred_region
      %s1041 = ssub.s32 128, 128
      %1042 = vsyncadd [#allocation5], %s1041
      %s1044 = sshll.u32 [#allocation11], 4
      %s1045 = int_to_ptr.vmem [resolvable:$true] %s1044
      %1047 = dma.vmem_to_hbm [thread:$0]  %s1045, 128, %s4, [#allocation5]
    $region37: #{tpu_custom_call.1} parent=1 // pred_fallthru
      _
    // Predicated region
    $region38: #{tpu_custom_call.1} parent=1 // pred_check
      _
    $region39: #{tpu_custom_call.1} parent=1 // pred_check_branch
      %1049 = sbr.rel (0) target = $region41
    $region40: #{tpu_custom_call.1} parent=1 // pred_region
      %1050 = dma.done [#allocation5], 128
    $region41: #{tpu_custom_call.1} parent=1 // pred_fallthru
      _
    %1051 = vsyncpa [#allocation4], 1
    %1052 = vsyncpa [#allocation7], 1
    %1053 = vsyncpa [#allocation10], 1
    %1054 = vsyncpa [#allocation5], 1

</llo_original>
